<compile_context>
chip_gen: v7x
topology: tpu7x:2x2x1
jax: 0.10.0
libtpu: 0.0.40
codegen_flags: <defaults>
</compile_context>

<pallas_src>
import functools

import jax
import jax.numpy as jnp
from jax import lax
from jax.experimental import pallas as pl
from jax.experimental.pallas import tpu as pltpu

_SQRT2 = 1.4142135623730951


def _to_i32(v):
    """Two's-complement int32 representation of an unsigned 32-bit constant."""
    v &= 0xFFFFFFFF
    return v - (1 << 32) if v >= (1 << 31) else v


_FMIX_C1 = _to_i32(0x85EBCA6B)   # murmur3 fmix32 constants
_FMIX_C2 = _to_i32(0xC2B2AE35)
_GOLDEN = _to_i32(0x9E3779B9)    # decorrelates different seeds

# Giles (2012) single-precision erfinv, central branch (w < 5), highest degree first.
_ERFINV_CENTRAL = (
    2.81022636e-08, 3.43273939e-07, -3.5233877e-06, -4.39150654e-06,
    2.1858087e-04, -1.25372503e-03, -4.17768164e-03, 2.46640727e-01,
    1.50140941e+00,
)


def _stochastic_dropout_kernel(seed_ref, x_ref, o_ref, *, coeffs, bias,
                               block_rows, lanes):
    f32 = jnp.float32
    shape = x_ref.shape  # (block_rows, lanes)

    # ---- counter-based PRNG: one 32-bit hash per element (portable, no pltpu.prng_*) --
    row = lax.broadcasted_iota(jnp.int32, shape, 0)
    col = lax.broadcasted_iota(jnp.int32, shape, 1)
    # global element index, offset by a seed scramble (wraps mod 2^32 — fine for noise)
    base = seed_ref[0] * _GOLDEN + pl.program_id(0) * (block_rows * lanes)
    h = base + row * lanes + col

    def srl(v, k):  # logical right shift on int32 (arithmetic shift + mask)
        return jnp.right_shift(v, k) & ((1 << (32 - k)) - 1)

    # murmur3 fmix32 finalizer: full avalanche, so consecutive indices decorrelate.
    h = h ^ srl(h, 16)
    h = h * _FMIX_C1
    h = h ^ srl(h, 13)
    h = h * _FMIX_C2
    h = h ^ srl(h, 16)

    # 23 random mantissa bits -> f32 in [1, 2) via exponent-OR (no int->float convert),
    # then map to t uniform in [-1, 1).
    mant = (h & 0x007FFFFF) | 0x3F800000
    f = lax.bitcast_convert_type(mant, jnp.float32)
    t = 2.0 * f - 3.0

    # sigma * z with z = sqrt(2)*erfinv(t) ~ N(0,1): Giles central branch only; w is
    # clamped at 5, saturating z at ~±2.9 sigma for the ~0.3% tail samples.
    w = jnp.minimum(-jnp.log((1.0 - t) * (1.0 + t)), 5.0) - 2.5
    p = f32(coeffs[0])
    for c in coeffs[1:]:
        p = p * w + f32(c)
    # coeffs are pre-scaled by sigma*sqrt(2), so p*t == sigma*z.
    sdo = jnp.exp(p * t + f32(bias))          # exp(N(-sigma^2/2, sigma)), mean-1 noise
    o_ref[...] = (x_ref[...].astype(f32) * sdo).astype(o_ref.dtype)


def stochastic_dropout(x, sigma, seed, *, training=True, lanes=512,
                       max_block_rows=2048):
    """Forward pass of StochasticDropout.  `seed` is an int32 array of shape (1,)."""
    if not training:
        return x  # eval mode: identity (sdo = 1)

    orig_shape = x.shape
    total = int(x.size)
    seed = jnp.asarray(seed, dtype=jnp.int32).reshape(1)

    # Lane-dense 2D view.  Pad only when total isn't a multiple of `lanes` — pad/slice
    # each cost a full extra HBM copy, so skip them whenever possible.
    rem = total % lanes
    flat = x.reshape(-1)
    if rem:
        flat = jnp.pad(flat, (0, lanes - rem))
    rows = flat.size // lanes
    x2d = flat.reshape(rows, lanes)

    # Biggest tile that fits comfortably everywhere (incl. v7x's 64 MiB VMEM/TC):
    # 2048x512 f32 = 4 MiB/block, <=16 MiB with double-buffered in+out.
    if rows <= max_block_rows:
        block_rows = rows            # single block == full dim (always legal)
    else:
        block_rows = max_block_rows  # multiple of 8; Pallas masks the partial last block
    grid = (pl.cdiv(rows, block_rows),)

    sigma = float(sigma)
    coeffs = tuple(c * sigma * _SQRT2 for c in _ERFINV_CENTRAL)  # fold sigma*sqrt(2)
    kern = functools.partial(_stochastic_dropout_kernel, coeffs=coeffs,
                             bias=-0.5 * sigma * sigma,
                             block_rows=block_rows, lanes=lanes)

    out2d = pl.pallas_call(
        kern,
        out_shape=jax.ShapeDtypeStruct((rows, lanes), x.dtype),
        grid_spec=pltpu.PrefetchScalarGridSpec(
            num_scalar_prefetch=1,                 # seed lives in SMEM
            grid=grid,
            in_specs=[pl.BlockSpec((block_rows, lanes), lambda i, s: (i, 0))],
            out_specs=pl.BlockSpec((block_rows, lanes), lambda i, s: (i, 0)),
        ),
        compiler_params=pltpu.CompilerParams(
            # Independent tiles: "parallel" lets v7x megacore shard the row axis
            # (switch to pltpu.CORE_PARALLEL if xprof shows one TC idle).
            dimension_semantics=("parallel",),
            vmem_limit_bytes=32 * 1024 * 1024,
        ),
    )(seed, x2d)

    out = out2d.reshape(-1)[:total] if rem else out2d
    return out.reshape(orig_shape)


if __name__ == "__main__":
    key = jax.random.PRNGKey(0)
    kx, ks = jax.random.split(key)

    sigma = 0.5
    x = jax.random.normal(kx, (2, 4, 16, 16), jnp.float32)
    seed = jax.random.randint(ks, (1,), 0, 2 ** 31 - 1, dtype=jnp.int32)

    # eval mode: identity
    y_eval = stochastic_dropout(x, sigma, seed, training=False)
    assert y_eval.shape == x.shape
    assert bool(jnp.all(y_eval == x))

    # training mode: x * log-normal noise
    y = stochastic_dropout(x, sigma, seed, training=True)
    y = jax.block_until_ready(y)
    assert y.shape == x.shape, y.shape
    assert bool(jnp.all(jnp.isfinite(y)))

    # Light statistical sanity check: log(y/x) ~ N(-sigma^2/2, sigma) (generous bounds).
    sel = jnp.abs(x) > 1e-4
    log_ratio = jnp.log((y / x)[sel])
    mean_log = float(jnp.mean(log_ratio))
    std_log = float(jnp.std(log_ratio))
    assert abs(mean_log - (-0.5 * sigma ** 2)) < 0.1, mean_log
    assert 0.4 < std_log < 0.6, std_log

    print("KERNEL_OK")
</pallas_src>

<mosaic_0001>
module attributes {stable_mosaic.version = 11 : i64} {
  func.func @_stochastic_dropout_kernel(%arg0: i32, %arg1: memref<1xi32, #tpu.memory_space<smem>>, %arg2: memref<4x512xf32, #tpu.memory_space<vmem>>, %arg3: memref<4x512xf32, #tpu.memory_space<vmem>>) attributes {dimension_semantics = [#tpu.dimension_semantics<parallel>], iteration_bounds = array<i64: 1>, scalar_prefetch = 1 : i64, scratch_operands = 0 : i64, tpu.core_type = #tpu.core_type<tc>, window_params = [{transform_indices = @transform_0, window_bounds = array<i64: 4, 512>}, {transform_indices = @transform_1, window_bounds = array<i64: 4, 512>}]} {
    %0 = tpu.iota {dimensions = array<i32: 0>} : vector<4x512xi32>
    %1 = tpu.iota {dimensions = array<i32: 1>} : vector<4x512xi32>
    %c0 = arith.constant 0 : index
    %2 = memref.load %arg1[%c0] : memref<1xi32, #tpu.memory_space<smem>>
    %c-1640531527_i32 = arith.constant -1640531527 : i32
    %3 = arith.muli %2, %c-1640531527_i32 : i32
    %c2048_i32 = arith.constant 2048 : i32
    %4 = arith.muli %arg0, %c2048_i32 : i32
    %5 = arith.addi %3, %4 : i32
    %c512_i32 = arith.constant 512 : i32
    %6 = vector.broadcast %c512_i32 : i32 to vector<4x512xi32>
    %7 = arith.muli %0, %6 : vector<4x512xi32>
    %8 = vector.broadcast %5 : i32 to vector<4x512xi32>
    %9 = arith.addi %8, %7 : vector<4x512xi32>
    %10 = arith.addi %9, %1 : vector<4x512xi32>
    %c16_i32 = arith.constant 16 : i32
    %11 = vector.broadcast %c16_i32 : i32 to vector<4x512xi32>
    %12 = arith.shrsi %10, %11 : vector<4x512xi32>
    %c65535_i32 = arith.constant 65535 : i32
    %13 = vector.broadcast %c65535_i32 : i32 to vector<4x512xi32>
    %14 = arith.andi %12, %13 : vector<4x512xi32>
    %15 = arith.xori %10, %14 : vector<4x512xi32>
    %c-2048144789_i32 = arith.constant -2048144789 : i32
    %16 = vector.broadcast %c-2048144789_i32 : i32 to vector<4x512xi32>
    %17 = arith.muli %15, %16 : vector<4x512xi32>
    %c13_i32 = arith.constant 13 : i32
    %18 = vector.broadcast %c13_i32 : i32 to vector<4x512xi32>
    %19 = arith.shrsi %17, %18 : vector<4x512xi32>
    %c524287_i32 = arith.constant 524287 : i32
    %20 = vector.broadcast %c524287_i32 : i32 to vector<4x512xi32>
    %21 = arith.andi %19, %20 : vector<4x512xi32>
    %22 = arith.xori %17, %21 : vector<4x512xi32>
    %c-1028477387_i32 = arith.constant -1028477387 : i32
    %23 = vector.broadcast %c-1028477387_i32 : i32 to vector<4x512xi32>
    %24 = arith.muli %22, %23 : vector<4x512xi32>
    %c16_i32_0 = arith.constant 16 : i32
    %25 = vector.broadcast %c16_i32_0 : i32 to vector<4x512xi32>
    %26 = arith.shrsi %24, %25 : vector<4x512xi32>
    %c65535_i32_1 = arith.constant 65535 : i32
    %27 = vector.broadcast %c65535_i32_1 : i32 to vector<4x512xi32>
    %28 = arith.andi %26, %27 : vector<4x512xi32>
    %29 = arith.xori %24, %28 : vector<4x512xi32>
    %c8388607_i32 = arith.constant 8388607 : i32
    %30 = vector.broadcast %c8388607_i32 : i32 to vector<4x512xi32>
    %31 = arith.andi %29, %30 : vector<4x512xi32>
    %c1065353216_i32 = arith.constant 1065353216 : i32
    %32 = vector.broadcast %c1065353216_i32 : i32 to vector<4x512xi32>
    %33 = arith.ori %31, %32 : vector<4x512xi32>
    %34 = tpu.bitcast %33 : vector<4x512xi32> -> vector<4x512xf32>
    %cst = arith.constant 2.000000e+00 : f32
    %35 = vector.broadcast %cst : f32 to vector<4x512xf32>
    %36 = arith.mulf %35, %34 : vector<4x512xf32>
    %cst_2 = arith.constant 3.000000e+00 : f32
    %37 = vector.broadcast %cst_2 : f32 to vector<4x512xf32>
    %38 = arith.subf %36, %37 : vector<4x512xf32>
    %cst_3 = arith.constant 1.000000e+00 : f32
    %39 = vector.broadcast %cst_3 : f32 to vector<4x512xf32>
    %40 = arith.subf %39, %38 : vector<4x512xf32>
    %cst_4 = arith.constant 1.000000e+00 : f32
    %41 = vector.broadcast %cst_4 : f32 to vector<4x512xf32>
    %42 = arith.addf %41, %38 : vector<4x512xf32>
    %43 = arith.mulf %40, %42 : vector<4x512xf32>
    %44 = math.log %43 : vector<4x512xf32>
    %cst_5 = arith.constant 0.000000e+00 : f32
    %45 = vector.broadcast %cst_5 : f32 to vector<4x512xf32>
    %46 = arith.subf %45, %44 : vector<4x512xf32>
    %cst_6 = arith.constant 5.000000e+00 : f32
    %47 = vector.broadcast %cst_6 : f32 to vector<4x512xf32>
    %48 = arith.minimumf %46, %47 : vector<4x512xf32>
    %cst_7 = arith.constant 2.500000e+00 : f32
    %49 = vector.broadcast %cst_7 : f32 to vector<4x512xf32>
    %50 = arith.subf %48, %49 : vector<4x512xf32>
    %cst_8 = arith.constant 1.9871301E-8 : f32
    %51 = vector.broadcast %cst_8 : f32 to vector<4x512xf32>
    %52 = arith.mulf %51, %50 : vector<4x512xf32>
    %cst_9 = arith.constant 2.42731318E-7 : f32
    %53 = vector.broadcast %cst_9 : f32 to vector<4x512xf32>
    %54 = arith.addf %52, %53 : vector<4x512xf32>
    %55 = arith.mulf %54, %50 : vector<4x512xf32>
    %cst_10 = arith.constant -2.49141135E-6 : f32
    %56 = vector.broadcast %cst_10 : f32 to vector<4x512xf32>
    %57 = arith.addf %55, %56 : vector<4x512xf32>
    %58 = arith.mulf %57, %50 : vector<4x512xf32>
    %cst_11 = arith.constant -3.10526411E-6 : f32
    %59 = vector.broadcast %cst_11 : f32 to vector<4x512xf32>
    %60 = arith.addf %58, %59 : vector<4x512xf32>
    %61 = arith.mulf %60, %50 : vector<4x512xf32>
    %cst_12 = arith.constant 1.5456001E-4 : f32
    %62 = vector.broadcast %cst_12 : f32 to vector<4x512xf32>
    %63 = arith.addf %61, %62 : vector<4x512xf32>
    %64 = arith.mulf %63, %50 : vector<4x512xf32>
    %cst_13 = arith.constant -8.8651746E-4 : f32
    %65 = vector.broadcast %cst_13 : f32 to vector<4x512xf32>
    %66 = arith.addf %64, %65 : vector<4x512xf32>
    %67 = arith.mulf %66, %50 : vector<4x512xf32>
    %cst_14 = arith.constant -0.00295406696 : f32
    %68 = vector.broadcast %cst_14 : f32 to vector<4x512xf32>
    %69 = arith.addf %67, %68 : vector<4x512xf32>
    %70 = arith.mulf %69, %50 : vector<4x512xf32>
    %cst_15 = arith.constant 0.174401328 : f32
    %71 = vector.broadcast %cst_15 : f32 to vector<4x512xf32>
    %72 = arith.addf %70, %71 : vector<4x512xf32>
    %73 = arith.mulf %72, %50 : vector<4x512xf32>
    %cst_16 = arith.constant 1.06165683 : f32
    %74 = vector.broadcast %cst_16 : f32 to vector<4x512xf32>
    %75 = arith.addf %73, %74 : vector<4x512xf32>
    %76 = arith.mulf %75, %38 : vector<4x512xf32>
    %cst_17 = arith.constant -1.250000e-01 : f32
    %77 = vector.broadcast %cst_17 : f32 to vector<4x512xf32>
    %78 = arith.addf %76, %77 : vector<4x512xf32>
    %79 = math.exp %78 : vector<4x512xf32>
    %c0_18 = arith.constant 0 : index
    %c0_19 = arith.constant 0 : index
    %80 = vector.load %arg2[%c0_18, %c0_19] : memref<4x512xf32, #tpu.memory_space<vmem>>, vector<4x512xf32>
    %81 = arith.mulf %80, %79 : vector<4x512xf32>
    %c0_20 = arith.constant 0 : index
    %c0_21 = arith.constant 0 : index
    %82 = vector.load %arg3[%c0_20, %c0_21] : memref<4x512xf32, #tpu.memory_space<vmem>>, vector<4x512xf32>
    tpu.vector_store %arg3[%c0_20, %c0_21], %81 {strides = array<i32>} : memref<4x512xf32, #tpu.memory_space<vmem>>, vector<4x512xf32>,
    return
  }
  func.func @transform_0(%arg0: i32, %arg1: memref<1xi32, #tpu.memory_space<smem>>) -> (i32, i32) {
    %c0_i32 = arith.constant 0 : i32
    %c0_i32_0 = arith.constant 0 : i32
    return %arg0, %c0_i32 : i32, i32
  }
  func.func @transform_1(%arg0: i32, %arg1: memref<1xi32, #tpu.memory_space<smem>>) -> (i32, i32) {
    %c0_i32 = arith.constant 0 : i32
    %c0_i32_0 = arith.constant 0 : i32
    return %arg0, %c0_i32 : i32, i32
  }
}

</mosaic_0001>

<llo_original>
// kernel: tpu_custom_call.1
$region0: #{tpu_custom_call.1}
  #allocation0 [shape = 'u32[]', space=smem, size = 0x4, offset = 0x4, fixed_abs, tag = 'smem constant byte address 0x4 - core index']
  #allocation1 [shape = 'u32[144,128]{1,0:T(1,128)}', space=vmem, size = 0x12000, scoped, tag = 'internal scratch']
  #allocation2 [shape = 's32[1]{0}', space=sflag, size = 0x4, scoped, tag = 'scoped memory for tpu_custom_call.1']
  #allocation3 [shape = 's32[1]{0:T(128)S(6)}', space=smem, size = 0x200, scoped, tag = 'prefetched SMEM operand 0']
  %s0 = inlined_call_operand.<no memory space> [shape: s32[1], index: 0, kind: input, shape index: {}]
  %s1 = inlined_call_operand.hbm [shape: f32[4,512], index: 1, kind: input, shape index: {}]
  %s2 = inlined_call_operand.hbm [shape: f32[4,512], index: 2, kind: output, shape index: {}]
  %s3 = sld [smem:[#allocation0]]
  $region18: #{tpu_custom_call.1} parent=0
    _
  %s5 = ssub.s32 1, %s3
  %s6 = scalar_select 0, %s5, %s3
  %7 = sst [smem:[#allocation3]] %s0
  $region1: #{tpu_custom_call.1} parent=0
    #allocation4 [shape = 'u8[8192]{0}', space=vmem, size = 0x2000, scoped, tag = 'input window, operand 1, single buffered']
    #allocation5 [shape = 's32[1]{0}', space=sflag, size = 0x4, scoped, tag = 'scoped memory for tpu_custom_call.1']
    #allocation6 [shape = 's32[1]{0}', space=sflag, size = 0x4, scoped, tag = 'scoped memory for tpu_custom_call.1']
    #allocation7 [shape = 'u8[8192]{0}', space=vmem, size = 0x2000, scoped, tag = 'output window, operand 0, single buffered']
    %8 = vsyncpa [#allocation5], 0
    %9 = vsyncpa [#allocation6], 0
    // Predicated region
    $region2: #{tpu_custom_call.1} parent=1 // pred_check
      _
    $region3: #{tpu_custom_call.1} parent=1 // pred_check_branch
      %11 = sbr.rel (0) target = $region5
    $region4: #{tpu_custom_call.1} parent=1 // pred_region
      %s13 = ssub.s32 256, 256
      %14 = vsyncadd [#allocation5], %s13
      %s16 = sshll.u32 [#allocation4], 4
      %s17 = int_to_ptr.vmem [resolvable:$true] %s16
      %19 = dma.hbm_to_vmem [thread:$0]  %s1, 256, %s17, [#allocation5]
    $region5: #{tpu_custom_call.1} parent=1 // pred_fallthru
      _
    // Predicated region
    $region6: #{tpu_custom_call.1} parent=1 // pred_check
      _
    $region7: #{tpu_custom_call.1} parent=1 // pred_check_branch
      %21 = sbr.rel (0) target = $region9
    $region8: #{tpu_custom_call.1} parent=1 // pred_region
      %22 = dma.done [#allocation5], 256
    $region9: #{tpu_custom_call.1} parent=1 // pred_fallthru
      _
    %v23 = vlaneseq
    %v24 = vshrl.u32 %v23, 7
    %v25 = vlaneseq
    %v26 = vand.u32 %v25, 127
    %v27 = vadd.s32 %v26, 128
    %v28 = vadd.s32 %v26, 256
    %v29 = vadd.s32 %v26, 384
    %s30 = sld [smem:[#allocation3]]
    %s31 = smul.u32 %s30, 2654435769
    %s32 = smul.u32 0, 2048
    %s33 = sadd.s32 %s31, %s32
    %v34 = vmul.u32 %v24, 512
    %v35 = vstv %s33
    %v36 = vadd.s32 %v35, %v34
    %v37 = vadd.s32 %v36, %v26
    %v38 = vadd.s32 %v36, %v27
    %v39 = vadd.s32 %v36, %v28
    %v40 = vadd.s32 %v36, %v29
    %v41 = vshra.s32 %v37, 16
    %v42 = vshra.s32 %v38, 16
    %v43 = vshra.s32 %v39, 16
    %v44 = vshra.s32 %v40, 16
    %v45 = vand.u32 %v41, 65535
    %v46 = vand.u32 %v42, 65535
    %v47 = vand.u32 %v43, 65535
    %v48 = vand.u32 %v44, 65535
    %v49 = vxor.u32 %v37, %v45
    %v50 = vxor.u32 %v38, %v46
    %v51 = vxor.u32 %v39, %v47
    %v52 = vxor.u32 %v40, %v48
    %v53 = vmul.u32 %v49, 2246822507
    %v54 = vmul.u32 %v50, 2246822507
    %v55 = vmul.u32 %v51, 2246822507
    %v56 = vmul.u32 %v52, 2246822507
    %v57 = vshra.s32 %v53, 13
    %v58 = vshra.s32 %v54, 13
    %v59 = vshra.s32 %v55, 13
    %v60 = vshra.s32 %v56, 13
    %v61 = vand.u32 %v57, 524287
    %v62 = vand.u32 %v58, 524287
    %v63 = vand.u32 %v59, 524287
    %v64 = vand.u32 %v60, 524287
    %v65 = vxor.u32 %v53, %v61
    %v66 = vxor.u32 %v54, %v62
    %v67 = vxor.u32 %v55, %v63
    %v68 = vxor.u32 %v56, %v64
    %v69 = vmul.u32 %v65, 3266489909
    %v70 = vmul.u32 %v66, 3266489909
    %v71 = vmul.u32 %v67, 3266489909
    %v72 = vmul.u32 %v68, 3266489909
    %v73 = vshra.s32 %v69, 16
    %v74 = vshra.s32 %v70, 16
    %v75 = vshra.s32 %v71, 16
    %v76 = vshra.s32 %v72, 16
    %v77 = vand.u32 %v73, 65535
    %v78 = vand.u32 %v74, 65535
    %v79 = vand.u32 %v75, 65535
    %v80 = vand.u32 %v76, 65535
    %v81 = vxor.u32 %v69, %v77
    %v82 = vxor.u32 %v70, %v78
    %v83 = vxor.u32 %v71, %v79
    %v84 = vxor.u32 %v72, %v80
    %v85 = vand.u32 %v81, 8388607
    %v86 = vand.u32 %v82, 8388607
    %v87 = vand.u32 %v83, 8388607
    %v88 = vand.u32 %v84, 8388607
    %v89 = vor.u32 %v85, 1065353216
    %v90 = vor.u32 %v86, 1065353216
    %v91 = vor.u32 %v87, 1065353216
    %v92 = vor.u32 %v88, 1065353216
    %v97 = vmul.f32 %v89, 2.0
    %v98 = vmul.f32 %v90, 2.0
    %v99 = vmul.f32 %v91, 2.0
    %v100 = vmul.f32 %v92, 2.0
    %v101 = vsub.f32 %v97, 3.0
    %v102 = vsub.f32 %v98, 3.0
    %v103 = vsub.f32 %v99, 3.0
    %v104 = vsub.f32 %v100, 3.0
    %v105 = vsub.f32 1.0, %v101
    %v106 = vsub.f32 1.0, %v102
    %v107 = vsub.f32 1.0, %v103
    %v108 = vsub.f32 1.0, %v104
    %v109 = vadd.f32 %v101, 1.0
    %v110 = vadd.f32 %v102, 1.0
    %v111 = vadd.f32 %v103, 1.0
    %v112 = vadd.f32 %v104, 1.0
    %v113 = vmul.f32 %v105, %v109
    %v114 = vmul.f32 %v106, %v110
    %v115 = vmul.f32 %v107, %v111
    %v116 = vmul.f32 %v108, %v112
    %v117 = vlog2.pop %v113
    %v118 = vmul.f32 %v117, 0.6931472
    %v119 = vlog2.pop %v114
    %v120 = vmul.f32 %v119, 0.6931472
    %v121 = vlog2.pop %v115
    %v122 = vmul.f32 %v121, 0.6931472
    %v123 = vlog2.pop %v116
    %v124 = vmul.f32 %v123, 0.6931472
    %v125 = vsub.f32 0.0, %v118
    %v126 = vsub.f32 0.0, %v120
    %v127 = vsub.f32 0.0, %v122
    %v128 = vsub.f32 0.0, %v124
    %v129 = vmin.f32 %v125, 5.0
    %v130 = vmin.f32 %v126, 5.0
    %v131 = vmin.f32 %v127, 5.0
    %v132 = vmin.f32 %v128, 5.0
    %v133 = vsub.f32 %v129, 2.5
    %v134 = vsub.f32 %v130, 2.5
    %v135 = vsub.f32 %v131, 2.5
    %v136 = vsub.f32 %v132, 2.5
    %v137 = vmul.f32 %v133, 1.9871301e-08
    %v138 = vmul.f32 %v134, 1.9871301e-08
    %v139 = vmul.f32 %v135, 1.9871301e-08
    %v140 = vmul.f32 %v136, 1.9871301e-08
    %v141 = vadd.f32 %v137, 2.4273132e-07
    %v142 = vadd.f32 %v138, 2.4273132e-07
    %v143 = vadd.f32 %v139, 2.4273132e-07
    %v144 = vadd.f32 %v140, 2.4273132e-07
    %v145 = vmul.f32 %v141, %v133
    %v146 = vmul.f32 %v142, %v134
    %v147 = vmul.f32 %v143, %v135
    %v148 = vmul.f32 %v144, %v136
    %v149 = vadd.f32 %v145, -2.4914114e-06
    %v150 = vadd.f32 %v146, -2.4914114e-06
    %v151 = vadd.f32 %v147, -2.4914114e-06
    %v152 = vadd.f32 %v148, -2.4914114e-06
    %v153 = vmul.f32 %v149, %v133
    %v154 = vmul.f32 %v150, %v134
    %v155 = vmul.f32 %v151, %v135
    %v156 = vmul.f32 %v152, %v136
    %v157 = vadd.f32 %v153, -3.105264e-06
    %v158 = vadd.f32 %v154, -3.105264e-06
    %v159 = vadd.f32 %v155, -3.105264e-06
    %v160 = vadd.f32 %v156, -3.105264e-06
    %v161 = vmul.f32 %v157, %v133
    %v162 = vmul.f32 %v158, %v134
    %v163 = vmul.f32 %v159, %v135
    %v164 = vmul.f32 %v160, %v136
    %v165 = vadd.f32 %v161, 0.00015456001
    %v166 = vadd.f32 %v162, 0.00015456001
    %v167 = vadd.f32 %v163, 0.00015456001
    %v168 = vadd.f32 %v164, 0.00015456001
    %v169 = vmul.f32 %v165, %v133
    %v170 = vmul.f32 %v166, %v134
    %v171 = vmul.f32 %v167, %v135
    %v172 = vmul.f32 %v168, %v136
    %v173 = vadd.f32 %v169, -0.00088651746
    %v174 = vadd.f32 %v170, -0.00088651746
    %v175 = vadd.f32 %v171, -0.00088651746
    %v176 = vadd.f32 %v172, -0.00088651746
    %v177 = vmul.f32 %v173, %v133
    %v178 = vmul.f32 %v174, %v134
    %v179 = vmul.f32 %v175, %v135
    %v180 = vmul.f32 %v176, %v136
    %v181 = vadd.f32 %v177, -0.002954067
    %v182 = vadd.f32 %v178, -0.002954067
    %v183 = vadd.f32 %v179, -0.002954067
    %v184 = vadd.f32 %v180, -0.002954067
    %v185 = vmul.f32 %v181, %v133
    %v186 = vmul.f32 %v182, %v134
    %v187 = vmul.f32 %v183, %v135
    %v188 = vmul.f32 %v184, %v136
    %v189 = vadd.f32 %v185, 0.17440133
    %v190 = vadd.f32 %v186, 0.17440133
    %v191 = vadd.f32 %v187, 0.17440133
    %v192 = vadd.f32 %v188, 0.17440133
    %v193 = vmul.f32 %v189, %v133
    %v194 = vmul.f32 %v190, %v134
    %v195 = vmul.f32 %v191, %v135
    %v196 = vmul.f32 %v192, %v136
    %v197 = vadd.f32 %v193, 1.0616568
    %v198 = vadd.f32 %v194, 1.0616568
    %v199 = vadd.f32 %v195, 1.0616568
    %v200 = vadd.f32 %v196, 1.0616568
    %v201 = vmul.f32 %v197, %v101
    %v202 = vmul.f32 %v198, %v102
    %v203 = vmul.f32 %v199, %v103
    %v204 = vmul.f32 %v200, %v104
    %v205 = vadd.f32 %v201, -0.125
    %v206 = vadd.f32 %v202, -0.125
    %v207 = vadd.f32 %v203, -0.125
    %v208 = vadd.f32 %v204, -0.125
    %v209 = vmul.f32 %v205, 1.442695
    %v210 = vpow.pop %v209
    %v211 = vmul.f32 %v206, 1.442695
    %v212 = vpow.pop %v211
    %v213 = vmul.f32 %v207, 1.442695
    %v214 = vpow.pop %v213
    %v215 = vmul.f32 %v208, 1.442695
    %v216 = vpow.pop %v215
    %v217 = vld [vmem:[#allocation4] sm:$0xff]
    %v218 = vld [vmem:[#allocation4 + $0x8] sm:$0xff]
    %v223 = vcombine.low %v210, %v212
    %v224 = vcombine.low %v214, %v216
    %v227 = vmul.f32 %v217, %v223
    %v228 = vmul.f32 %v218, %v224
    %229 = vst [vmem:[#allocation7] sm:$0xff] %v227
    %230 = vst [vmem:[#allocation7 + $0x8] sm:$0xff] %v228
    // Predicated region
    $region10: #{tpu_custom_call.1} parent=1 // pred_check
      _
    $region11: #{tpu_custom_call.1} parent=1 // pred_check_branch
      %232 = sbr.rel (0) target = $region13
    $region12: #{tpu_custom_call.1} parent=1 // pred_region
      %s234 = ssub.s32 256, 256
      %235 = vsyncadd [#allocation6], %s234
      %s237 = sshll.u32 [#allocation7], 4
      %s238 = int_to_ptr.vmem [resolvable:$true] %s237
      %240 = dma.vmem_to_hbm [thread:$0]  %s238, 256, %s2, [#allocation6]
    $region13: #{tpu_custom_call.1} parent=1 // pred_fallthru
      _
    // Predicated region
    $region14: #{tpu_custom_call.1} parent=1 // pred_check
      _
    $region15: #{tpu_custom_call.1} parent=1 // pred_check_branch
      %242 = sbr.rel (0) target = $region17
    $region16: #{tpu_custom_call.1} parent=1 // pred_region
      %243 = dma.done [#allocation6], 256
    $region17: #{tpu_custom_call.1} parent=1 // pred_fallthru
      _
    %244 = vsyncpa [#allocation5], 1
    %245 = vsyncpa [#allocation6], 1

</llo_original>
